<compile_context>
chip_gen: v7x
topology: tpu7x:2x2x1
jax: 0.10.0
libtpu: 0.0.40
codegen_flags: <defaults>
</compile_context>

<pallas_src>
import jax
import jax.numpy as jnp
from jax import lax
from jax.experimental import pallas as pl
from jax.experimental.pallas import tpu as pltpu


def gmf_kernel(u_idx_ref, i_idx_ref,      # (TB, 1) int32 index blocks (VMEM)
               u_tab_ref, i_tab_ref,      # (U, D), (I, D) VMEM-resident tables
               w_ref, b_ref,              # (1, D) VMEM weight row, (1, 1) SMEM bias
               o_ref):                    # (1, 1, TB) lane-dense output block
    tb = u_idx_ref.shape[0]
    U = u_tab_ref.shape[0]
    I = i_tab_ref.shape[0]
    tab_dtype = u_tab_ref.dtype

    # --- On-chip gather via one-hot MXU matmul (tables are VMEM-resident). ---
    u_onehot = (u_idx_ref[...] ==
                lax.broadcasted_iota(jnp.int32, (tb, U), 1)).astype(tab_dtype)
    i_onehot = (i_idx_ref[...] ==
                lax.broadcasted_iota(jnp.int32, (tb, I), 1)).astype(tab_dtype)

    u_emb = jnp.dot(u_onehot, u_tab_ref[...],
                    preferred_element_type=jnp.float32)        # (TB, D) f32
    i_emb = jnp.dot(i_onehot, i_tab_ref[...],
                    preferred_element_type=jnp.float32)        # (TB, D) f32

    # --- GMF: elementwise product, affine(1) folded into the VPU pass, sigmoid. ---
    prod = u_emb * i_emb * w_ref[...].astype(jnp.float32)      # (TB, D) * (1, D)
    logits = jnp.sum(prod, axis=-1) + b_ref[0, 0]              # (TB,)  XLU lane reduce
    o_ref[0, 0, :] = jax.nn.sigmoid(logits)                    # lane-dense store


def gmf_forward(user_idx, item_idx, user_table, item_table, w, b, *, tile_b=128):
    B = int(user_idx.shape[0])
    U, D = user_table.shape
    I, _ = item_table.shape

    # Small/medium-table fast path: tables live in VMEM for the whole kernel and
    # rows are gathered on-chip.  Guard against tables that would blow the scoped
    # VMEM budget (16 MiB default on v5e, 32 MiB on v6e/v7x; v7x physical = 64 MiB)
    # or make the (tile_b, n_rows) one-hot mask unreasonable.
    tab_bytes = (U + I) * D * jnp.dtype(user_table.dtype).itemsize
    assert tab_bytes <= 4 * 1024 * 1024 and max(U, I) <= 4096, (
        "embedding tables too large for the VMEM-resident one-hot gather path")
    # TODO(synk): for large tables, fall back to HBM-resident tables (pl.ANY) with a
    # double-buffered, aggregate-wait row-gather DMA pipeline instead of this path.

    num_tiles = -(-B // tile_b)
    Bp = num_tiles * tile_b

    # Clamp (safe gather, matches jnp.take clamp behavior) and pad to a full tile.
    u_idx = jnp.clip(user_idx.astype(jnp.int32), 0, U - 1)
    i_idx = jnp.clip(item_idx.astype(jnp.int32), 0, I - 1)
    u_idx = jnp.pad(u_idx, (0, Bp - B)).reshape(Bp, 1)
    i_idx = jnp.pad(i_idx, (0, Bp - B)).reshape(Bp, 1)

    w_row = w.reshape(1, D).astype(jnp.float32)
    b_sc = b.reshape(1, 1).astype(jnp.float32)

    out = pl.pallas_call(
        gmf_kernel,
        out_shape=jax.ShapeDtypeStruct((num_tiles, 1, tile_b), jnp.float32),
        grid_spec=pltpu.PrefetchScalarGridSpec(
            num_scalar_prefetch=0,
            grid=(num_tiles,),
            in_specs=[
                pl.BlockSpec((tile_b, 1), lambda t: (t, 0)),          # user indices
                pl.BlockSpec((tile_b, 1), lambda t: (t, 0)),          # item indices
                pl.BlockSpec((U, D), lambda t: (0, 0)),               # user table (VMEM resident)
                pl.BlockSpec((I, D), lambda t: (0, 0)),               # item table (VMEM resident)
                pl.BlockSpec((1, D), lambda t: (0, 0)),               # affine weight row
                pl.BlockSpec(memory_space=pltpu.MemorySpace.SMEM),    # affine bias
            ],
            out_specs=pl.BlockSpec((1, 1, tile_b), lambda t: (t, 0, 0)),
        ),
        compiler_params=pltpu.CompilerParams(
            dimension_semantics=("parallel",)),
    )(u_idx, i_idx, user_table, item_table, w_row, b_sc)

    return out.reshape(Bp, 1)[:B]


def gmf_reference(user_idx, item_idx, user_table, item_table, w, b):
    u = jnp.take(user_table, user_idx, axis=0)
    i = jnp.take(item_table, item_idx, axis=0)
    logits = (u * i) @ w.reshape(-1, 1).astype(jnp.float32) + b.reshape(1, 1)
    return jax.nn.sigmoid(logits)


if __name__ == "__main__":
    # Config consistent with the module's __init__ (small demo shapes).
    n_users, n_items, emb_dim = 64, 48, 32
    batch = 256  # 2 even grid steps of tile_b=128 -> both v7x TensorCores get work

    key = jax.random.PRNGKey(0)
    k_u, k_i, k_w, k_b, k_ui, k_ii = jax.random.split(key, 6)

    # nn.init.normal_(std=0.01) for embeddings; uniform init for the Linear layer.
    user_table = 0.01 * jax.random.normal(k_u, (n_users, emb_dim), dtype=jnp.float32)
    item_table = 0.01 * jax.random.normal(k_i, (n_items, emb_dim), dtype=jnp.float32)
    bound = 1.0 / float(emb_dim) ** 0.5
    w = jax.random.uniform(k_w, (emb_dim,), minval=-bound, maxval=bound, dtype=jnp.float32)
    b = jax.random.uniform(k_b, (1,), minval=-bound, maxval=bound, dtype=jnp.float32)

    user_indices = jax.random.randint(k_ui, (batch,), 0, n_users, dtype=jnp.int32)
    item_indices = jax.random.randint(k_ii, (batch,), 0, n_items, dtype=jnp.int32)

    out = gmf_forward(user_indices, item_indices, user_table, item_table, w, b)
    out = jax.block_until_ready(out)

    ref = gmf_reference(user_indices, item_indices, user_table, item_table, w, b)
    assert out.shape == (batch, 1)
    assert jnp.allclose(out, ref, atol=1e-5, rtol=1e-5)

    print("KERNEL_OK")
</pallas_src>

<mosaic_0001>
module attributes {stable_mosaic.version = 11 : i64} {
  func.func @gmf_kernel(%arg0: i32, %arg1: memref<128x1xi32, #tpu.memory_space<vmem>>, %arg2: memref<128x1xi32, #tpu.memory_space<vmem>>, %arg3: memref<64x32xf32, #tpu.memory_space<vmem>>, %arg4: memref<48x32xf32, #tpu.memory_space<vmem>>, %arg5: memref<1x32xf32, #tpu.memory_space<vmem>>, %arg6: memref<1x1xf32, #tpu.memory_space<smem>>, %arg7: memref<1x1x128xf32, #tpu.memory_space<vmem>>) attributes {dimension_semantics = [#tpu.dimension_semantics<parallel>], iteration_bounds = array<i64: 2>, scalar_prefetch = 0 : i64, scratch_operands = 0 : i64, tpu.core_type = #tpu.core_type<tc>, window_params = [{transform_indices = @transform_0, window_bounds = array<i64: 128, 1>}, {transform_indices = @transform_1, window_bounds = array<i64: 128, 1>}, {pipeline_mode = #tpu.pipeline_mode<synchronous>, transform_indices = @transform_2, window_bounds = array<i64: 64, 32>}, {pipeline_mode = #tpu.pipeline_mode<synchronous>, transform_indices = @transform_3, window_bounds = array<i64: 48, 32>}, {pipeline_mode = #tpu.pipeline_mode<synchronous>, transform_indices = @transform_4, window_bounds = array<i64: 1, 32>}, {transform_indices = @transform_5, window_bounds = array<i64: 1, 1>}, {transform_indices = @transform_6, window_bounds = array<i64: 1, 1, 128>}]} {
    %c0 = arith.constant 0 : index
    %c0_0 = arith.constant 0 : index
    %0 = vector.load %arg1[%c0, %c0_0] : memref<128x1xi32, #tpu.memory_space<vmem>>, vector<128x1xi32>
    %1 = tpu.iota {dimensions = array<i32: 1>} : vector<128x64xi32>
    %2 = vector.broadcast %0 : vector<128x1xi32> to vector<128x64xi32>
    %3 = arith.cmpi eq, %2, %1 : vector<128x64xi32>
    %4 = arith.extui %3 : vector<128x64xi1> to vector<128x64xi32>
    %5 = arith.sitofp %4 : vector<128x64xi32> to vector<128x64xf32>
    %c0_1 = arith.constant 0 : index
    %c0_2 = arith.constant 0 : index
    %6 = vector.load %arg2[%c0_1, %c0_2] : memref<128x1xi32, #tpu.memory_space<vmem>>, vector<128x1xi32>
    %7 = tpu.iota {dimensions = array<i32: 1>} : vector<128x48xi32>
    %8 = vector.broadcast %6 : vector<128x1xi32> to vector<128x48xi32>
    %9 = arith.cmpi eq, %8, %7 : vector<128x48xi32>
    %10 = arith.extui %9 : vector<128x48xi1> to vector<128x48xi32>
    %11 = arith.sitofp %10 : vector<128x48xi32> to vector<128x48xf32>
    %c0_3 = arith.constant 0 : index
    %c0_4 = arith.constant 0 : index
    %12 = vector.load %arg3[%c0_3, %c0_4] : memref<64x32xf32, #tpu.memory_space<vmem>>, vector<64x32xf32>
    %cst = arith.constant dense<0.000000e+00> : vector<128x32xf32>
    %13 = tpu.matmul %5, %12, %cst {dimension_numbers = #tpu.dot_dimension_numbers<[1], [0], [0], [1], [0, 0, 1, 1], [], []>} : vector<128x64xf32>, vector<64x32xf32>, vector<128x32xf32> -> vector<128x32xf32>
    %c0_5 = arith.constant 0 : index
    %c0_6 = arith.constant 0 : index
    %14 = vector.load %arg4[%c0_5, %c0_6] : memref<48x32xf32, #tpu.memory_space<vmem>>, vector<48x32xf32>
    %cst_7 = arith.constant dense<0.000000e+00> : vector<128x32xf32>
    %15 = tpu.matmul %11, %14, %cst_7 {dimension_numbers = #tpu.dot_dimension_numbers<[1], [0], [0], [1], [0, 0, 1, 1], [], []>} : vector<128x48xf32>, vector<48x32xf32>, vector<128x32xf32> -> vector<128x32xf32>
    %16 = arith.mulf %13, %15 : vector<128x32xf32>
    %c0_8 = arith.constant 0 : index
    %c0_9 = arith.constant 0 : index
    %17 = vector.load %arg5[%c0_8, %c0_9] : memref<1x32xf32, #tpu.memory_space<vmem>>, vector<1x32xf32>
    %18 = vector.broadcast %17 : vector<1x32xf32> to vector<128x32xf32>
    %19 = arith.mulf %16, %18 : vector<128x32xf32>
    %cst_10 = arith.constant dense<0.000000e+00> : vector<128xf32>
    %20 = vector.multi_reduction <add>, %19, %cst_10 [1] : vector<128x32xf32> to vector<128xf32>
    %c0_11 = arith.constant 0 : index
    %c0_12 = arith.constant 0 : index
    %21 = memref.load %arg6[%c0_11, %c0_12] : memref<1x1xf32, #tpu.memory_space<smem>>
    %22 = vector.broadcast %21 : f32 to vector<128xf32>
    %23 = arith.addf %20, %22 : vector<128xf32>
    %24 = arith.negf %23 : vector<128xf32>
    %25 = math.exp %24 : vector<128xf32>
    %cst_13 = arith.constant 1.000000e+00 : f32
    %26 = vector.broadcast %cst_13 : f32 to vector<128xf32>
    %27 = arith.addf %26, %25 : vector<128xf32>
    %28 = arith.divf %26, %27 : vector<128xf32>
    %c0_14 = arith.constant 0 : index
    %c0_15 = arith.constant 0 : index
    %c0_16 = arith.constant 0 : index
    %29 = vector.load %arg7[%c0_14, %c0_15, %c0_16] : memref<1x1x128xf32, #tpu.memory_space<vmem>>, vector<1x1x128xf32>
    %30 = vector.shape_cast %29 : vector<1x1x128xf32> to vector<128xf32>
    %31 = vector.shape_cast %28 : vector<128xf32> to vector<1x1x128xf32>
    tpu.vector_store %arg7[%c0_14, %c0_15, %c0_16], %31 {strides = array<i32>} : memref<1x1x128xf32, #tpu.memory_space<vmem>>, vector<1x1x128xf32>,
    return
  }
  func.func @transform_0(%arg0: i32) -> (i32, i32) {
    %c0_i32 = arith.constant 0 : i32
    %c0_i32_0 = arith.constant 0 : i32
    return %arg0, %c0_i32 : i32, i32
  }
  func.func @transform_1(%arg0: i32) -> (i32, i32) {
    %c0_i32 = arith.constant 0 : i32
    %c0_i32_0 = arith.constant 0 : i32
    return %arg0, %c0_i32 : i32, i32
  }
  func.func @transform_2(%arg0: i32) -> (i32, i32) {
    %c0_i32 = arith.constant 0 : i32
    %c0_i32_0 = arith.constant 0 : i32
    %c0_i32_1 = arith.constant 0 : i32
    return %c0_i32, %c0_i32_0 : i32, i32
  }
  func.func @transform_3(%arg0: i32) -> (i32, i32) {
    %c0_i32 = arith.constant 0 : i32
    %c0_i32_0 = arith.constant 0 : i32
    %c0_i32_1 = arith.constant 0 : i32
    return %c0_i32, %c0_i32_0 : i32, i32
  }
  func.func @transform_4(%arg0: i32) -> (i32, i32) {
    %c0_i32 = arith.constant 0 : i32
    %c0_i32_0 = arith.constant 0 : i32
    %c0_i32_1 = arith.constant 0 : i32
    return %c0_i32, %c0_i32_0 : i32, i32
  }
  func.func @transform_5(%arg0: i32) -> (i32, i32) {
    %c0_i32 = arith.constant 0 : i32
    %c0_i32_0 = arith.constant 0 : i32
    %c0_i32_1 = arith.constant 0 : i32
    return %c0_i32, %c0_i32_0 : i32, i32
  }
  func.func @transform_6(%arg0: i32) -> (i32, i32, i32) {
    %c0_i32 = arith.constant 0 : i32
    %c0_i32_0 = arith.constant 0 : i32
    %c0_i32_1 = arith.constant 0 : i32
    return %arg0, %c0_i32, %c0_i32_0 : i32, i32, i32
  }
}

</mosaic_0001>

<llo_original>
// kernel: tpu_custom_call.1
$region0: #{tpu_custom_call.1}
  #allocation0 [shape = 'u32[]', space=smem, size = 0x4, offset = 0x4, fixed_abs, tag = 'smem constant byte address 0x4 - core index']
  #allocation1 [shape = 'u32[144,128]{1,0:T(1,128)}', space=vmem, size = 0x12000, scoped, tag = 'internal scratch']
  #allocation2 [shape = 'f32[1,1]{1,0:T(1,128)S(6)}', space=smem, size = 0x200, scoped, tag = 'scoped memory for tpu_custom_call.1']
  %s0 = inlined_call_operand.vmem [shape: s32[256,1], index: 0, kind: input, shape index: {}]
  %s1 = inlined_call_operand.vmem [shape: s32[256,1], index: 1, kind: input, shape index: {}]
  %s2 = inlined_call_operand.vmem [shape: f32[64,32], index: 2, kind: input, shape index: {}]
  %s3 = inlined_call_operand.vmem [shape: f32[48,32], index: 3, kind: input, shape index: {}]
  %s4 = inlined_call_operand.vmem [shape: f32[1,32], index: 4, kind: input, shape index: {}]
  %s5 = inlined_call_operand.<no memory space> [shape: f32[1,1], index: 5, kind: input, shape index: {}]
  %s6 = inlined_call_operand.hbm [shape: f32[2,1,128], index: 6, kind: output, shape index: {}]
  %s7 = sld [smem:[#allocation0]]
  $region57: #{tpu_custom_call.1} parent=0
    _
  %s9 = ssub.s32 1, %s7
  %s10 = scalar_select 0, %s9, %s7
  %11 = sst [smem:[#allocation2]] %s5
  $region1: #{tpu_custom_call.1} parent=0
    #allocation3 [shape = 'u8[1024]{0}', space=vmem, size = 0x400, scoped, tag = 'output window, operand 0']
    #allocation4 [shape = 's32[2]{0}', space=sflag, size = 0x8, scoped, tag = 'scoped memory for tpu_custom_call.1']
    %12 = vsyncpa [#allocation4], 0
    %s13 = scalar_lea.sflag [#allocation4], 1
    %14 = vsyncpa %s13, 0
    loop: start=0, step=1, limit=4
    $region2: #{tpu_custom_call.1} parent=1 // loop_pre_header
      _
    $region3: #{tpu_custom_call.1} parent=1 // loop_header
      %s16 = sphi 0, %s20
      %p17 = scmp.ge.s32.totalorder %s16, 4
      %s26 = sphi 0, %s28
      %s29 = sphi 0, %s26
      %s30 = sphi 0, %s29
      %s46 = sphi 0, %s30
      %s52 = sphi 0, %s54
      %s55 = sphi 0, %s52
      %s56 = sphi 0, %s55
      %s72 = sphi 0, %s56
      %s76 = sphi 0, %s76
      %s78 = sphi 0, %s76
      %s79 = sphi 0, %s78
      %s93 = sphi 0, %s79
      %s97 = sphi 0, %s97
      %s99 = sphi 0, %s97
      %s100 = sphi 0, %s99
      %s114 = sphi 0, %s100
      %s118 = sphi 0, %s118
      %s120 = sphi 0, %s118
      %s121 = sphi 0, %s120
      %s135 = sphi 0, %s121
      %s139 = sphi 0, %s139
      %s141 = sphi 0, %s139
      %s142 = sphi 0, %s141
      %s156 = sphi 0, %s142
      %s162 = sphi 0, %s164
      %s165 = sphi 0, %s162
      %s166 = sphi 0, %s165
      %s182 = sphi 0, %s166
    $region4: #{tpu_custom_call.1} parent=1 // loop_header_branch
      %19 = sbr.rel (%p17) target = $region8
    $region5: #{tpu_custom_call.1} parent=1 // loop_body
      %s21 = ssub.s32 %s16, 1
      %s22 = ssub.s32 %s16, 2
      %s23 = sadd.s32 %s16, 1
      %s24 = ssub.s32 %s16, %s23
      %p25 = scmp.eq.s32.totalorder %s24, 0
      %s27 = sadd.s32 %s26, 1
      %s28 = scalar_select %p25, %s26, %s27
      %p31 = pneg %p25
      %p32 = scmp.eq.s32.totalorder %s16, 1
      %p33 = por %p31, %p32
      %p34 = scmp.ne.s32.totalorder %s26, %s29
      %p35 = scmp.eq.s32.totalorder %s16, 0
      %p36 = por %p34, %p35
      %p37 = scmp.ne.s32.totalorder %s26, %s29
      %p38 = scmp.eq.s32.totalorder %s21, 1
      %p39 = por %p37, %p38
      %p40 = scmp.ne.s32.totalorder %s29, %s30
      %p41 = scmp.eq.s32.totalorder %s21, 0
      %p42 = por %p40, %p41
      %p43 = scmp.ne.s32.totalorder %s29, %s30
      %p44 = scmp.eq.s32.totalorder %s22, 1
      %p45 = por %p43, %p44
      %p47 = scmp.ne.s32.totalorder %s30, %s46
      %p48 = scmp.eq.s32.totalorder %s22, 0
      %p49 = por %p47, %p48
      %s50 = ssub.s32 %s16, %s23
      %p51 = scmp.eq.s32.totalorder %s50, 0
      %s53 = sadd.s32 %s52, 1
      %s54 = scalar_select %p51, %s52, %s53
      %p57 = pneg %p51
      %p58 = scmp.eq.s32.totalorder %s16, 1
      %p59 = por %p57, %p58
      %p60 = scmp.ne.s32.totalorder %s52, %s55
      %p61 = scmp.eq.s32.totalorder %s16, 0
      %p62 = por %p60, %p61
      %p63 = scmp.ne.s32.totalorder %s52, %s55
      %p64 = scmp.eq.s32.totalorder %s21, 1
      %p65 = por %p63, %p64
      %p66 = scmp.ne.s32.totalorder %s55, %s56
      %p67 = scmp.eq.s32.totalorder %s21, 0
      %p68 = por %p66, %p67
      %p69 = scmp.ne.s32.totalorder %s55, %s56
      %p70 = scmp.eq.s32.totalorder %s22, 1
      %p71 = por %p69, %p70
      %p73 = scmp.ne.s32.totalorder %s56, %s72
      %p74 = scmp.eq.s32.totalorder %s22, 0
      %p75 = por %p73, %p74
      %s77 = sadd.s32 %s76, 1
      %p80 = scmp.eq.s32.totalorder %s16, 1
      %p81 = scmp.ne.s32.totalorder %s76, %s78
      %p82 = scmp.eq.s32.totalorder %s16, 0
      %p83 = por %p81, %p82
      %p84 = scmp.ne.s32.totalorder %s76, %s78
      %p85 = scmp.eq.s32.totalorder %s21, 1
      %p86 = por %p84, %p85
      %p87 = scmp.ne.s32.totalorder %s78, %s79
      %p88 = scmp.eq.s32.totalorder %s21, 0
      %p89 = por %p87, %p88
      %p90 = scmp.ne.s32.totalorder %s78, %s79
      %p91 = scmp.eq.s32.totalorder %s22, 1
      %p92 = por %p90, %p91
      %p94 = scmp.ne.s32.totalorder %s79, %s93
      %p95 = scmp.eq.s32.totalorder %s22, 0
      %p96 = por %p94, %p95
      %s98 = sadd.s32 %s97, 1
      %p101 = scmp.eq.s32.totalorder %s16, 1
      %p102 = scmp.ne.s32.totalorder %s97, %s99
      %p103 = scmp.eq.s32.totalorder %s16, 0
      %p104 = por %p102, %p103
      %p105 = scmp.ne.s32.totalorder %s97, %s99
      %p106 = scmp.eq.s32.totalorder %s21, 1
      %p107 = por %p105, %p106
      %p108 = scmp.ne.s32.totalorder %s99, %s100
      %p109 = scmp.eq.s32.totalorder %s21, 0
      %p110 = por %p108, %p109
      %p111 = scmp.ne.s32.totalorder %s99, %s100
      %p112 = scmp.eq.s32.totalorder %s22, 1
      %p113 = por %p111, %p112
      %p115 = scmp.ne.s32.totalorder %s100, %s114
      %p116 = scmp.eq.s32.totalorder %s22, 0
      %p117 = por %p115, %p116
      %s119 = sadd.s32 %s118, 1
      %p122 = scmp.eq.s32.totalorder %s16, 1
      %p123 = scmp.ne.s32.totalorder %s118, %s120
      %p124 = scmp.eq.s32.totalorder %s16, 0
      %p125 = por %p123, %p124
      %p126 = scmp.ne.s32.totalorder %s118, %s120
      %p127 = scmp.eq.s32.totalorder %s21, 1
      %p128 = por %p126, %p127
      %p129 = scmp.ne.s32.totalorder %s120, %s121
      %p130 = scmp.eq.s32.totalorder %s21, 0
      %p131 = por %p129, %p130
      %p132 = scmp.ne.s32.totalorder %s120, %s121
      %p133 = scmp.eq.s32.totalorder %s22, 1
      %p134 = por %p132, %p133
      %p136 = scmp.ne.s32.totalorder %s121, %s135
      %p137 = scmp.eq.s32.totalorder %s22, 0
      %p138 = por %p136, %p137
      %s140 = sadd.s32 %s139, 1
      %p143 = scmp.eq.s32.totalorder %s16, 1
      %p144 = scmp.ne.s32.totalorder %s139, %s141
      %p145 = scmp.eq.s32.totalorder %s16, 0
      %p146 = por %p144, %p145
      %p147 = scmp.ne.s32.totalorder %s139, %s141
      %p148 = scmp.eq.s32.totalorder %s21, 1
      %p149 = por %p147, %p148
      %p150 = scmp.ne.s32.totalorder %s141, %s142
      %p151 = scmp.eq.s32.totalorder %s21, 0
      %p152 = por %p150, %p151
      %p153 = scmp.ne.s32.totalorder %s141, %s142
      %p154 = scmp.eq.s32.totalorder %s22, 1
      %p155 = por %p153, %p154
      %p157 = scmp.ne.s32.totalorder %s142, %s156
      %p158 = scmp.eq.s32.totalorder %s22, 0
      %p159 = por %p157, %p158
      %s160 = ssub.s32 %s16, %s23
      %p161 = scmp.eq.s32.totalorder %s160, 0
      %s163 = sadd.s32 %s162, 1
      %s164 = scalar_select %p161, %s162, %s163
      %p167 = pneg %p161
      %p168 = scmp.eq.s32.totalorder %s16, 1
      %p169 = por %p167, %p168
      %p170 = scmp.ne.s32.totalorder %s162, %s165
      %p171 = scmp.eq.s32.totalorder %s16, 0
      %p172 = por %p170, %p171
      %p173 = scmp.ne.s32.totalorder %s162, %s165
      %p174 = scmp.eq.s32.totalorder %s21, 1
      %p175 = por %p173, %p174
      %p176 = scmp.ne.s32.totalorder %s165, %s166
      %p177 = scmp.eq.s32.totalorder %s21, 0
      %p178 = por %p176, %p177
      %p179 = scmp.ne.s32.totalorder %s165, %s166
      %p180 = scmp.eq.s32.totalorder %s22, 1
      %p181 = por %p179, %p180
      %p183 = scmp.ne.s32.totalorder %s166, %s182
      %p184 = scmp.eq.s32.totalorder %s22, 0
      %p185 = por %p183, %p184
      %p186 = scmp.le.s32.totalorder 1, %s16
      %p187 = scmp.lt.s32.totalorder %s16, 3
      %p188 = pnand %p186, %p187
      %p189 = pneg %p188
      // Predicated region
      $region9: #{tpu_custom_call.1} parent=5 // pred_check
        _
      $region10: #{tpu_custom_call.1} parent=5 // pred_check_branch
        %191 = sbr.rel (%p188) target = $region12
      $region11: #{tpu_custom_call.1} parent=5 // pred_region
        %s192 = ssub.s32 %s16, 1
        // Predicated region
        $region13: #{tpu_custom_call.1} parent=11 // pred_check
          %p193 = pneg %p89
        $region14: #{tpu_custom_call.1} parent=11 // pred_check_branch
          %195 = sbr.rel (%p193) target = $region16
        $region15: #{tpu_custom_call.1} parent=11 // pred_region
          _
        $region16: #{tpu_custom_call.1} parent=11 // pred_fallthru
          _
        // Predicated region
        $region17: #{tpu_custom_call.1} parent=11 // pred_check
          %p196 = pneg %p110
        $region18: #{tpu_custom_call.1} parent=11 // pred_check_branch
          %198 = sbr.rel (%p196) target = $region20
        $region19: #{tpu_custom_call.1} parent=11 // pred_region
          _
        $region20: #{tpu_custom_call.1} parent=11 // pred_fallthru
          _
        // Predicated region
        $region21: #{tpu_custom_call.1} parent=11 // pred_check
          %p199 = pneg %p131
        $region22: #{tpu_custom_call.1} parent=11 // pred_check_branch
          %201 = sbr.rel (%p199) target = $region24
        $region23: #{tpu_custom_call.1} parent=11 // pred_region
          _
        $region24: #{tpu_custom_call.1} parent=11 // pred_fallthru
          _
        // Predicated region
        $region25: #{tpu_custom_call.1} parent=11 // pred_check
          %p202 = pneg %p152
        $region26: #{tpu_custom_call.1} parent=11 // pred_check_branch
          %204 = sbr.rel (%p202) target = $region28
        $region27: #{tpu_custom_call.1} parent=11 // pred_region
          _
        $region28: #{tpu_custom_call.1} parent=11 // pred_fallthru
          _
      $region12: #{tpu_custom_call.1} parent=5 // pred_fallthru
        _
      %p205 = scmp.lt.s32.totalorder %s16, 2
      // Predicated region
      $region29: #{tpu_custom_call.1} parent=5 // pred_check
        %p206 = pneg %p205
      $region30: #{tpu_custom_call.1} parent=5 // pred_check_branch
        %208 = sbr.rel (%p206) target = $region32
      $region31: #{tpu_custom_call.1} parent=5 // pred_region
        // Predicated region
        $region33: #{tpu_custom_call.1} parent=31 // pred_check
          %p209 = pneg %p36
        $region34: #{tpu_custom_call.1} parent=31 // pred_check_branch
          %211 = sbr.rel (%p209) target = $region36
        $region35: #{tpu_custom_call.1} parent=31 // pred_region
          %s212 = smul.u32 16, %s16
          %p213 = scmp.lt.s32.totalorder %s212, 31
          %s214 = scalar_select %p213, %s212, 31
          %s215 = smul.addr %s214, 8
          %s216 = scalar_lea.vmem %s0, %s215
          %s217 = smul.u32 16, %s16
        $region36: #{tpu_custom_call.1} parent=31 // pred_fallthru
          _
        // Predicated region
        $region37: #{tpu_custom_call.1} parent=31 // pred_check
          %p218 = pneg %p62
        $region38: #{tpu_custom_call.1} parent=31 // pred_check_branch
          %220 = sbr.rel (%p218) target = $region40
        $region39: #{tpu_custom_call.1} parent=31 // pred_region
          %s221 = smul.u32 16, %s16
          %p222 = scmp.lt.s32.totalorder %s221, 31
          %s223 = scalar_select %p222, %s221, 31
          %s224 = smul.addr %s223, 8
          %s225 = scalar_lea.vmem %s1, %s224
          %s226 = smul.u32 16, %s16
        $region40: #{tpu_custom_call.1} parent=31 // pred_fallthru
          _
      $region32: #{tpu_custom_call.1} parent=5 // pred_fallthru
        _
      %p227 = scmp.le.s32.totalorder 1, %s16
      %p228 = scmp.lt.s32.totalorder %s16, 3
      %p229 = pnand %p227, %p228
      %p230 = pneg %p229
      // Predicated region
      $region41: #{tpu_custom_call.1} parent=5 // pred_check
        _
      $region42: #{tpu_custom_call.1} parent=5 // pred_check_branch
        %232 = sbr.rel (%p229) target = $region44
      $region43: #{tpu_custom_call.1} parent=5 // pred_region
        %s233 = ssub.s32 %s16, 1
        %s234 = smul.u32 16, %s21
        %p235 = scmp.lt.s32.totalorder %s234, 31
        %s236 = scalar_select %p235, %s234, 31
        %s237 = smul.addr %s236, 8
        %s238 = scalar_lea.vmem %s0, %s237
        %p239 = pneg %p42
        %p240 = pneg %p39
        %s241 = smul.u32 16, %s21
        %p242 = scmp.lt.s32.totalorder %s241, 31
        %s243 = scalar_select %p242, %s241, 31
        %s244 = smul.addr %s243, 8
        %s245 = scalar_lea.vmem %s1, %s244
        %p246 = pneg %p68
        %p247 = pneg %p65
        %p248 = pneg %p89
        %p249 = pneg %p86
        %p250 = pneg %p110
        %p251 = pneg %p107
        %p252 = pneg %p131
        %p253 = pneg %p128
        %p254 = pneg %p152
        %p255 = pneg %p149
        %p256 = pneg %p178
        %p257 = pneg %p175
        %s258 = sand.u32 %s165, 1
        %s259 = scalar_lea.sflag [#allocation4], %s258
        %s260 = sand.u32 %s165, 1
        %s261 = scalar_lea.vmem [#allocation3], %s260
        %s262 = smul.u32 16, %s21
        %p263 = scmp.lt.s32.totalorder %s262, 31
        %s264 = scalar_select %p263, %s262, 31
        %s265 = smul.addr %s264, 8
        %s266 = scalar_lea.vmem %s0, %s265
        %s267 = smul.u32 16, %s21
        %s268 = smul.u32 16, %s21
        %p269 = scmp.lt.s32.totalorder %s268, 31
        %s270 = scalar_select %p269, %s268, 31
        %s271 = smul.addr %s270, 8
        %s272 = scalar_lea.vmem %s1, %s271
        %s273 = smul.u32 16, %s21
        %v274 = vld [vmem:[%s266] sm:$0xff]
        %v275 = vld [vmem:[%s266 + $0x8] sm:$0xff]
        %v276 = vld [vmem:[%s266 + $0x10] sm:$0xff]
        %v277 = vld [vmem:[%s266 + $0x18] sm:$0xff]
        %v278 = vld [vmem:[%s266 + $0x20] sm:$0xff]
        %v279 = vld [vmem:[%s266 + $0x28] sm:$0xff]
        %v280 = vld [vmem:[%s266 + $0x30] sm:$0xff]
        %v281 = vld [vmem:[%s266 + $0x38] sm:$0xff]
        %v282 = vld [vmem:[%s266 + $0x40] sm:$0xff]
        %v283 = vld [vmem:[%s266 + $0x48] sm:$0xff]
        %v284 = vld [vmem:[%s266 + $0x50] sm:$0xff]
        %v285 = vld [vmem:[%s266 + $0x58] sm:$0xff]
        %v286 = vld [vmem:[%s266 + $0x60] sm:$0xff]
        %v287 = vld [vmem:[%s266 + $0x68] sm:$0xff]
        %v288 = vld [vmem:[%s266 + $0x70] sm:$0xff]
        %v289 = vld [vmem:[%s266 + $0x78] sm:$0xff]
        %v290 = vlaneseq
        %v291 = vand.u32 %v290, 127
        %292 = vset.pattern.permute.xlu0 0
        %293 = vperm.xlu0 %292, %v274
        %v294 = vpop.permute.xlu0 %293
        %295 = vset.pattern.permute.xlu0 0
        %296 = vperm.xlu0 %295, %v275
        %v297 = vpop.permute.xlu0 %296
        %298 = vset.pattern.permute.xlu0 0
        %299 = vperm.xlu0 %298, %v276
        %v300 = vpop.permute.xlu0 %299
        %301 = vset.pattern.permute.xlu0 0
        %302 = vperm.xlu0 %301, %v277
        %v303 = vpop.permute.xlu0 %302
        %304 = vset.pattern.permute.xlu0 0
        %305 = vperm.xlu0 %304, %v278
        %v306 = vpop.permute.xlu0 %305
        %307 = vset.pattern.permute.xlu0 0
        %308 = vperm.xlu0 %307, %v279
        %v309 = vpop.permute.xlu0 %308
        %310 = vset.pattern.permute.xlu0 0
        %311 = vperm.xlu0 %310, %v280
        %v312 = vpop.permute.xlu0 %311
        %313 = vset.pattern.permute.xlu0 0
        %314 = vperm.xlu0 %313, %v281
        %v315 = vpop.permute.xlu0 %314
        %316 = vset.pattern.permute.xlu0 0
        %317 = vperm.xlu0 %316, %v282
        %v318 = vpop.permute.xlu0 %317
        %319 = vset.pattern.permute.xlu0 0
        %320 = vperm.xlu0 %319, %v283
        %v321 = vpop.permute.xlu0 %320
        %322 = vset.pattern.permute.xlu0 0
        %323 = vperm.xlu0 %322, %v284
        %v324 = vpop.permute.xlu0 %323
        %325 = vset.pattern.permute.xlu0 0
        %326 = vperm.xlu0 %325, %v285
        %v327 = vpop.permute.xlu0 %326
        %328 = vset.pattern.permute.xlu0 0
        %329 = vperm.xlu0 %328, %v286
        %v330 = vpop.permute.xlu0 %329
        %331 = vset.pattern.permute.xlu0 0
        %332 = vperm.xlu0 %331, %v287
        %v333 = vpop.permute.xlu0 %332
        %334 = vset.pattern.permute.xlu0 0
        %335 = vperm.xlu0 %334, %v288
        %v336 = vpop.permute.xlu0 %335
        %337 = vset.pattern.permute.xlu0 0
        %338 = vperm.xlu0 %337, %v289
        %v339 = vpop.permute.xlu0 %338
        %vm340 = vcmp.eq.s32.totalorder %v294, %v291
        %vm341 = vcmp.eq.s32.totalorder %v297, %v291
        %vm342 = vcmp.eq.s32.totalorder %v300, %v291
        %vm343 = vcmp.eq.s32.totalorder %v303, %v291
        %vm344 = vcmp.eq.s32.totalorder %v306, %v291
        %vm345 = vcmp.eq.s32.totalorder %v309, %v291
        %vm346 = vcmp.eq.s32.totalorder %v312, %v291
        %vm347 = vcmp.eq.s32.totalorder %v315, %v291
        %vm348 = vcmp.eq.s32.totalorder %v318, %v291
        %vm349 = vcmp.eq.s32.totalorder %v321, %v291
        %vm350 = vcmp.eq.s32.totalorder %v324, %v291
        %vm351 = vcmp.eq.s32.totalorder %v327, %v291
        %vm352 = vcmp.eq.s32.totalorder %v330, %v291
        %vm353 = vcmp.eq.s32.totalorder %v333, %v291
        %vm354 = vcmp.eq.s32.totalorder %v336, %v291
        %vm355 = vcmp.eq.s32.totalorder %v339, %v291
        %v356 = vsel %vm340, 1, 0
        %v357 = vsel %vm341, 1, 0
        %v358 = vsel %vm342, 1, 0
        %v359 = vsel %vm343, 1, 0
        %v360 = vsel %vm344, 1, 0
        %v361 = vsel %vm345, 1, 0
        %v362 = vsel %vm346, 1, 0
        %v363 = vsel %vm347, 1, 0
        %v364 = vsel %vm348, 1, 0
        %v365 = vsel %vm349, 1, 0
        %v366 = vsel %vm350, 1, 0
        %v367 = vsel %vm351, 1, 0
        %v368 = vsel %vm352, 1, 0
        %v369 = vsel %vm353, 1, 0
        %v370 = vsel %vm354, 1, 0
        %v371 = vsel %vm355, 1, 0
        %v372 = vcvt.s32.f32 %v356
        %v373 = vcvt.s32.f32 %v357
        %v374 = vcvt.s32.f32 %v358
        %v375 = vcvt.s32.f32 %v359
        %v376 = vcvt.s32.f32 %v360
        %v377 = vcvt.s32.f32 %v361
        %v378 = vcvt.s32.f32 %v362
        %v379 = vcvt.s32.f32 %v363
        %v380 = vcvt.s32.f32 %v364
        %v381 = vcvt.s32.f32 %v365
        %v382 = vcvt.s32.f32 %v366
        %v383 = vcvt.s32.f32 %v367
        %v384 = vcvt.s32.f32 %v368
        %v385 = vcvt.s32.f32 %v369
        %v386 = vcvt.s32.f32 %v370
        %v387 = vcvt.s32.f32 %v371
        %v388 = vld [vmem:[%s272] sm:$0xff]
        %v389 = vld [vmem:[%s272 + $0x8] sm:$0xff]
        %v390 = vld [vmem:[%s272 + $0x10] sm:$0xff]
        %v391 = vld [vmem:[%s272 + $0x18] sm:$0xff]
        %v392 = vld [vmem:[%s272 + $0x20] sm:$0xff]
        %v393 = vld [vmem:[%s272 + $0x28] sm:$0xff]
        %v394 = vld [vmem:[%s272 + $0x30] sm:$0xff]
        %v395 = vld [vmem:[%s272 + $0x38] sm:$0xff]
        %v396 = vld [vmem:[%s272 + $0x40] sm:$0xff]
        %v397 = vld [vmem:[%s272 + $0x48] sm:$0xff]
        %v398 = vld [vmem:[%s272 + $0x50] sm:$0xff]
        %v399 = vld [vmem:[%s272 + $0x58] sm:$0xff]
        %v400 = vld [vmem:[%s272 + $0x60] sm:$0xff]
        %v401 = vld [vmem:[%s272 + $0x68] sm:$0xff]
        %v402 = vld [vmem:[%s272 + $0x70] sm:$0xff]
        %v403 = vld [vmem:[%s272 + $0x78] sm:$0xff]
        %404 = vset.pattern.permute.xlu0 0
        %405 = vperm.xlu0 %404, %v388
        %v406 = vpop.permute.xlu0 %405
        %407 = vset.pattern.permute.xlu0 0
        %408 = vperm.xlu0 %407, %v389
        %v409 = vpop.permute.xlu0 %408
        %410 = vset.pattern.permute.xlu0 0
        %411 = vperm.xlu0 %410, %v390
        %v412 = vpop.permute.xlu0 %411
        %413 = vset.pattern.permute.xlu0 0
        %414 = vperm.xlu0 %413, %v391
        %v415 = vpop.permute.xlu0 %414
        %416 = vset.pattern.permute.xlu0 0
        %417 = vperm.xlu0 %416, %v392
        %v418 = vpop.permute.xlu0 %417
        %419 = vset.pattern.permute.xlu0 0
        %420 = vperm.xlu0 %419, %v393
        %v421 = vpop.permute.xlu0 %420
        %422 = vset.pattern.permute.xlu0 0
        %423 = vperm.xlu0 %422, %v394
        %v424 = vpop.permute.xlu0 %423
        %425 = vset.pattern.permute.xlu0 0
        %426 = vperm.xlu0 %425, %v395
        %v427 = vpop.permute.xlu0 %426
        %428 = vset.pattern.permute.xlu0 0
        %429 = vperm.xlu0 %428, %v396
        %v430 = vpop.permute.xlu0 %429
        %431 = vset.pattern.permute.xlu0 0
        %432 = vperm.xlu0 %431, %v397
        %v433 = vpop.permute.xlu0 %432
        %434 = vset.pattern.permute.xlu0 0
        %435 = vperm.xlu0 %434, %v398
        %v436 = vpop.permute.xlu0 %435
        %437 = vset.pattern.permute.xlu0 0
        %438 = vperm.xlu0 %437, %v399
        %v439 = vpop.permute.xlu0 %438
        %440 = vset.pattern.permute.xlu0 0
        %441 = vperm.xlu0 %440, %v400
        %v442 = vpop.permute.xlu0 %441
        %443 = vset.pattern.permute.xlu0 0
        %444 = vperm.xlu0 %443, %v401
        %v445 = vpop.permute.xlu0 %444
        %446 = vset.pattern.permute.xlu0 0
        %447 = vperm.xlu0 %446, %v402
        %v448 = vpop.permute.xlu0 %447
        %449 = vset.pattern.permute.xlu0 0
        %450 = vperm.xlu0 %449, %v403
        %v451 = vpop.permute.xlu0 %450
        %vm452 = vcmp.eq.s32.totalorder %v406, %v291
        %vm453 = vcmp.eq.s32.totalorder %v409, %v291
        %vm454 = vcmp.eq.s32.totalorder %v412, %v291
        %vm455 = vcmp.eq.s32.totalorder %v415, %v291
        %vm456 = vcmp.eq.s32.totalorder %v418, %v291
        %vm457 = vcmp.eq.s32.totalorder %v421, %v291
        %vm458 = vcmp.eq.s32.totalorder %v424, %v291
        %vm459 = vcmp.eq.s32.totalorder %v427, %v291
        %vm460 = vcmp.eq.s32.totalorder %v430, %v291
        %vm461 = vcmp.eq.s32.totalorder %v433, %v291
        %vm462 = vcmp.eq.s32.totalorder %v436, %v291
        %vm463 = vcmp.eq.s32.totalorder %v439, %v291
        %vm464 = vcmp.eq.s32.totalorder %v442, %v291
        %vm465 = vcmp.eq.s32.totalorder %v445, %v291
        %vm466 = vcmp.eq.s32.totalorder %v448, %v291
        %vm467 = vcmp.eq.s32.totalorder %v451, %v291
        %v468 = vsel %vm452, 1, 0
        %v469 = vsel %vm453, 1, 0
        %v470 = vsel %vm454, 1, 0
        %v471 = vsel %vm455, 1, 0
        %v472 = vsel %vm456, 1, 0
        %v473 = vsel %vm457, 1, 0
        %v474 = vsel %vm458, 1, 0
        %v475 = vsel %vm459, 1, 0
        %v476 = vsel %vm460, 1, 0
        %v477 = vsel %vm461, 1, 0
        %v478 = vsel %vm462, 1, 0
        %v479 = vsel %vm463, 1, 0
        %v480 = vsel %vm464, 1, 0
        %v481 = vsel %vm465, 1, 0
        %v482 = vsel %vm466, 1, 0
        %v483 = vsel %vm467, 1, 0
        %v484 = vcvt.s32.f32 %v468
        %v485 = vcvt.s32.f32 %v469
        %v486 = vcvt.s32.f32 %v470
        %v487 = vcvt.s32.f32 %v471
        %v488 = vcvt.s32.f32 %v472
        %v489 = vcvt.s32.f32 %v473
        %v490 = vcvt.s32.f32 %v474
        %v491 = vcvt.s32.f32 %v475
        %v492 = vcvt.s32.f32 %v476
        %v493 = vcvt.s32.f32 %v477
        %v494 = vcvt.s32.f32 %v478
        %v495 = vcvt.s32.f32 %v479
        %v496 = vcvt.s32.f32 %v480
        %v497 = vcvt.s32.f32 %v481
        %v498 = vcvt.s32.f32 %v482
        %v499 = vcvt.s32.f32 %v483
        %v500 = vld [vmem:[%s2] sm:$0xff]
        %v501 = vld [vmem:[%s2 + $0x8] sm:$0xff]
        %v502 = vld [vmem:[%s2 + $0x10] sm:$0xff]
        %v503 = vld [vmem:[%s2 + $0x18] sm:$0xff]
        %v504 = vld [vmem:[%s2 + $0x20] sm:$0xff]
        %v505 = vld [vmem:[%s2 + $0x28] sm:$0xff]
        %v506 = vld [vmem:[%s2 + $0x30] sm:$0xff]
        %v507 = vld [vmem:[%s2 + $0x38] sm:$0xff]
        %vm508 = vcmask 523264
        %v510 = vsel %vm508, %v372, 0
        %v513 = vsel %vm508, %v373, 0
        %v516 = vsel %vm508, %v374, 0
        %v519 = vsel %vm508, %v375, 0
        %v522 = vsel %vm508, %v376, 0
        %v525 = vsel %vm508, %v377, 0
        %v528 = vsel %vm508, %v378, 0
        %v531 = vsel %vm508, %v379, 0
        %v534 = vsel %vm508, %v380, 0
        %v537 = vsel %vm508, %v381, 0
        %v540 = vsel %vm508, %v382, 0
        %v543 = vsel %vm508, %v383, 0
        %v546 = vsel %vm508, %v384, 0
        %v549 = vsel %vm508, %v385, 0
        %v552 = vsel %vm508, %v386, 0
        %v555 = vsel %vm508, %v387, 0
        %557 = vmatprep.subr.mxu0 0.0
        %558 = vmatpush1.msra.mxu0 %v500
        %559 = vmatprep.subr.mxu0 0.0
        %560 = vmatpush1.msra.mxu0 %v501
        %561 = vmatprep.subr.mxu0 0.0
        %562 = vmatpush1.msra.mxu0 %v502
        %563 = vmatprep.subr.mxu0 0.0
        %564 = vmatpush1.msra.mxu0 %v503
        %565 = vmatprep.subr.mxu0 0.0
        %566 = vmatpush1.msra.mxu0 %v504
        %567 = vmatprep.subr.mxu0 0.0
        %568 = vmatpush1.msra.mxu0 %v505
        %569 = vmatprep.subr.mxu0 0.0
        %570 = vmatpush1.msra.mxu0 %v506
        %571 = vmatprep.subr.mxu0 0.0
        %572 = vmatpush1.msra.mxu0 %v507
        %573 = vmatprep.subr.mxu0 0.0
        %574 = vmatpush1.msra.mxu0 0.0
        %575 = vmatprep.subr.mxu0 0.0
        %576 = vmatpush1.msra.mxu0 0.0
        %577 = vmatprep.subr.mxu0 0.0
        %578 = vmatpush1.msra.mxu0 0.0
        %579 = vmatprep.subr.mxu0 0.0
        %580 = vmatpush1.msra.mxu0 0.0
        %581 = vmatprep.subr.mxu0 0.0
        %582 = vmatpush1.msra.mxu0 0.0
        %583 = vmatprep.subr.mxu0 0.0
        %584 = vmatpush1.msra.mxu0 0.0
        %585 = vmatprep.subr.mxu0 0.0
        %586 = vmatpush1.msra.mxu0 0.0
        %587 = vmatprep.subr.mxu0 0.0
        %588 = vmatpush1.msra.mxu0 0.0
        %589 = vmatprep.subr.mxu0 0.0
        %590 = vmatpush1.msra.mxu0 0.0
        %591 = vmatprep.subr.mxu0 0.0
        %592 = vmatpush1.msra.mxu0 0.0
        %593 = vmatprep.subr.mxu0 0.0
        %594 = vmatpush1.msra.mxu0 0.0
        %595 = vmatprep.subr.mxu0 0.0
        %596 = vmatpush1.msra.mxu0 0.0
        %597 = vmatprep.subr.mxu0 0.0
        %598 = vmatpush1.msra.mxu0 0.0
        %599 = vmatprep.subr.mxu0 0.0
        %600 = vmatpush1.msra.mxu0 0.0
        %601 = vmatprep.subr.mxu0 0.0
        %602 = vmatpush1.msra.mxu0 0.0
        %603 = vmatprep.subr.mxu0 0.0
        %604 = vmatpush1.msra.mxu0 0.0
        %605 = vmatprep.subr.mxu0 0.0
        %606 = vmatpush1.msra.mxu0 0.0
        %607 = vmatprep.subr.mxu0 0.0
        %608 = vmatpush1.msra.mxu0 0.0
        %609 = vmatprep.subr.mxu0 0.0
        %610 = vmatpush1.msra.mxu0 0.0
        %611 = vmatprep.subr.mxu0 0.0
        %612 = vmatpush1.msra.mxu0 0.0
        %613 = vmatprep.subr.mxu0 0.0
        %614 = vmatpush1.msra.mxu0 0.0
        %615 = vmatprep.subr.mxu0 0.0
        %616 = vmatpush1.msra.mxu0 0.0
        %617 = vmatprep.subr.mxu0 0.0
        %618 = vmatpush1.msra.mxu0 0.0
        %619 = vmatprep.subr.mxu0 0.0
        %620 = vmatpush1.msra.mxu0 0.0
        %621 = vmatprep.mubr.f32.mxu0 0.0
        %622 = vmatmul.mubr.f32.gmra.mrb[0].mxu0 %v510
        %v623 = vpop.f32.mrb[0].mxu0
        %v624 = vadd.f32 0.0, %v623
        %v625 = vpop.f32.mrb[0].mxu0
        %626 = vmatprep.mubr.f32.mxu0 0.0
        %627 = vmatmul.mubr.f32.gmra.mrb[0].mxu0 %v513
        %v628 = vpop.f32.mrb[0].mxu0
        %v629 = vadd.f32 0.0, %v628
        %v630 = vpop.f32.mrb[0].mxu0
        %631 = vmatprep.mubr.f32.mxu0 0.0
        %632 = vmatmul.mubr.f32.gmra.mrb[0].mxu0 %v516
        %v633 = vpop.f32.mrb[0].mxu0
        %v634 = vadd.f32 0.0, %v633
        %v635 = vpop.f32.mrb[0].mxu0
        %636 = vmatprep.mubr.f32.mxu0 0.0
        %637 = vmatmul.mubr.f32.gmra.mrb[0].mxu0 %v519
        %v638 = vpop.f32.mrb[0].mxu0
        %v639 = vadd.f32 0.0, %v638
        %v640 = vpop.f32.mrb[0].mxu0
        %641 = vmatprep.mubr.f32.mxu0 0.0
        %642 = vmatmul.mubr.f32.gmra.mrb[0].mxu0 %v522
        %v643 = vpop.f32.mrb[0].mxu0
        %v644 = vadd.f32 0.0, %v643
        %v645 = vpop.f32.mrb[0].mxu0
        %646 = vmatprep.mubr.f32.mxu0 0.0
        %647 = vmatmul.mubr.f32.gmra.mrb[0].mxu0 %v525
        %v648 = vpop.f32.mrb[0].mxu0
        %v649 = vadd.f32 0.0, %v648
        %v650 = vpop.f32.mrb[0].mxu0
        %651 = vmatprep.mubr.f32.mxu0 0.0
        %652 = vmatmul.mubr.f32.gmra.mrb[0].mxu0 %v528
        %v653 = vpop.f32.mrb[0].mxu0
        %v654 = vadd.f32 0.0, %v653
        %v655 = vpop.f32.mrb[0].mxu0
        %656 = vmatprep.mubr.f32.mxu0 0.0
        %657 = vmatmul.mubr.f32.gmra.mrb[0].mxu0 %v531
        %v658 = vpop.f32.mrb[0].mxu0
        %v659 = vadd.f32 0.0, %v658
        %v660 = vpop.f32.mrb[0].mxu0
        %661 = vmatprep.mubr.f32.mxu0 0.0
        %662 = vmatmul.mubr.f32.gmra.mrb[0].mxu0 %v534
        %v663 = vpop.f32.mrb[0].mxu0
        %v664 = vadd.f32 0.0, %v663
        %v665 = vpop.f32.mrb[0].mxu0
        %666 = vmatprep.mubr.f32.mxu0 0.0
        %667 = vmatmul.mubr.f32.gmra.mrb[0].mxu0 %v537
        %v668 = vpop.f32.mrb[0].mxu0
        %v669 = vadd.f32 0.0, %v668
        %v670 = vpop.f32.mrb[0].mxu0
        %671 = vmatprep.mubr.f32.mxu0 0.0
        %672 = vmatmul.mubr.f32.gmra.mrb[0].mxu0 %v540
        %v673 = vpop.f32.mrb[0].mxu0
        %v674 = vadd.f32 0.0, %v673
        %v675 = vpop.f32.mrb[0].mxu0
        %676 = vmatprep.mubr.f32.mxu0 0.0
        %677 = vmatmul.mubr.f32.gmra.mrb[0].mxu0 %v543
        %v678 = vpop.f32.mrb[0].mxu0
        %v679 = vadd.f32 0.0, %v678
        %v680 = vpop.f32.mrb[0].mxu0
        %681 = vmatprep.mubr.f32.mxu0 0.0
        %682 = vmatmul.mubr.f32.gmra.mrb[0].mxu0 %v546
        %v683 = vpop.f32.mrb[0].mxu0
        %v684 = vadd.f32 0.0, %v683
        %v685 = vpop.f32.mrb[0].mxu0
        %686 = vmatprep.mubr.f32.mxu0 0.0
        %687 = vmatmul.mubr.f32.gmra.mrb[0].mxu0 %v549
        %v688 = vpop.f32.mrb[0].mxu0
        %v689 = vadd.f32 0.0, %v688
        %v690 = vpop.f32.mrb[0].mxu0
        %691 = vmatprep.mubr.f32.mxu0 0.0
        %692 = vmatmul.mubr.f32.gmra.mrb[0].mxu0 %v552
        %v693 = vpop.f32.mrb[0].mxu0
        %v694 = vadd.f32 0.0, %v693
        %v695 = vpop.f32.mrb[0].mxu0
        %696 = vmatprep.mubr.f32.mxu0 0.0
        %697 = vmatmul.mubr.f32.gmra.mrb[0].mxu0 %v555
        %v698 = vpop.f32.mrb[0].mxu0
        %v699 = vadd.f32 0.0, %v698
        %v700 = vpop.f32.mrb[0].mxu0
        %701 = vdwg.mxu0
        %v702 = vld [vmem:[%s3] sm:$0xff]
        %v703 = vld [vmem:[%s3 + $0x8] sm:$0xff]
        %v704 = vld [vmem:[%s3 + $0x10] sm:$0xff]
        %v705 = vld [vmem:[%s3 + $0x18] sm:$0xff]
        %v706 = vld [vmem:[%s3 + $0x20] sm:$0xff]
        %v707 = vld [vmem:[%s3 + $0x28] sm:$0xff]
        %vm708 = vcmask 392192
        %v710 = vsel %vm708, %v484, 0
        %v713 = vsel %vm708, %v485, 0
        %v716 = vsel %vm708, %v486, 0
        %v719 = vsel %vm708, %v487, 0
        %v722 = vsel %vm708, %v488, 0
        %v725 = vsel %vm708, %v489, 0
        %v728 = vsel %vm708, %v490, 0
        %v731 = vsel %vm708, %v491, 0
        %v734 = vsel %vm708, %v492, 0
        %v737 = vsel %vm708, %v493, 0
        %v740 = vsel %vm708, %v494, 0
        %v743 = vsel %vm708, %v495, 0
        %v746 = vsel %vm708, %v496, 0
        %v749 = vsel %vm708, %v497, 0
        %v752 = vsel %vm708, %v498, 0
        %v755 = vsel %vm708, %v499, 0
        %757 = vmatprep.subr.mxu0 0.0
        %758 = vmatpush1.msra.mxu0 %v702
        %759 = vmatprep.subr.mxu0 0.0
        %760 = vmatpush1.msra.mxu0 %v703
        %761 = vmatprep.subr.mxu0 0.0
        %762 = vmatpush1.msra.mxu0 %v704
        %763 = vmatprep.subr.mxu0 0.0
        %764 = vmatpush1.msra.mxu0 %v705
        %765 = vmatprep.subr.mxu0 0.0
        %766 = vmatpush1.msra.mxu0 %v706
        %767 = vmatprep.subr.mxu0 0.0
        %768 = vmatpush1.msra.mxu0 %v707
        %769 = vmatprep.subr.mxu0 0.0
        %770 = vmatpush1.msra.mxu0 0.0
        %771 = vmatprep.subr.mxu0 0.0
        %772 = vmatpush1.msra.mxu0 0.0
        %773 = vmatprep.subr.mxu0 0.0
        %774 = vmatpush1.msra.mxu0 0.0
        %775 = vmatprep.subr.mxu0 0.0
        %776 = vmatpush1.msra.mxu0 0.0
        %777 = vmatprep.subr.mxu0 0.0
        %778 = vmatpush1.msra.mxu0 0.0
        %779 = vmatprep.subr.mxu0 0.0
        %780 = vmatpush1.msra.mxu0 0.0
        %781 = vmatprep.subr.mxu0 0.0
        %782 = vmatpush1.msra.mxu0 0.0
        %783 = vmatprep.subr.mxu0 0.0
        %784 = vmatpush1.msra.mxu0 0.0
        %785 = vmatprep.subr.mxu0 0.0
        %786 = vmatpush1.msra.mxu0 0.0
        %787 = vmatprep.subr.mxu0 0.0
        %788 = vmatpush1.msra.mxu0 0.0
        %789 = vmatprep.subr.mxu0 0.0
        %790 = vmatpush1.msra.mxu0 0.0
        %791 = vmatprep.subr.mxu0 0.0
        %792 = vmatpush1.msra.mxu0 0.0
        %793 = vmatprep.subr.mxu0 0.0
        %794 = vmatpush1.msra.mxu0 0.0
        %795 = vmatprep.subr.mxu0 0.0
        %796 = vmatpush1.msra.mxu0 0.0
        %797 = vmatprep.subr.mxu0 0.0
        %798 = vmatpush1.msra.mxu0 0.0
        %799 = vmatprep.subr.mxu0 0.0
        %800 = vmatpush1.msra.mxu0 0.0
        %801 = vmatprep.subr.mxu0 0.0
        %802 = vmatpush1.msra.mxu0 0.0
        %803 = vmatprep.subr.mxu0 0.0
        %804 = vmatpush1.msra.mxu0 0.0
        %805 = vmatprep.subr.mxu0 0.0
        %806 = vmatpush1.msra.mxu0 0.0
        %807 = vmatprep.subr.mxu0 0.0
        %808 = vmatpush1.msra.mxu0 0.0
        %809 = vmatprep.subr.mxu0 0.0
        %810 = vmatpush1.msra.mxu0 0.0
        %811 = vmatprep.subr.mxu0 0.0
        %812 = vmatpush1.msra.mxu0 0.0
        %813 = vmatprep.subr.mxu0 0.0
        %814 = vmatpush1.msra.mxu0 0.0
        %815 = vmatprep.subr.mxu0 0.0
        %816 = vmatpush1.msra.mxu0 0.0
        %817 = vmatprep.subr.mxu0 0.0
        %818 = vmatpush1.msra.mxu0 0.0
        %819 = vmatprep.subr.mxu0 0.0
        %820 = vmatpush1.msra.mxu0 0.0
        %821 = vmatprep.mubr.f32.mxu0 0.0
        %822 = vmatmul.mubr.f32.gmra.mrb[0].mxu0 %v710
        %v823 = vpop.f32.mrb[0].mxu0
        %v824 = vadd.f32 0.0, %v823
        %v825 = vpop.f32.mrb[0].mxu0
        %826 = vmatprep.mubr.f32.mxu0 0.0
        %827 = vmatmul.mubr.f32.gmra.mrb[0].mxu0 %v713
        %v828 = vpop.f32.mrb[0].mxu0
        %v829 = vadd.f32 0.0, %v828
        %v830 = vpop.f32.mrb[0].mxu0
        %831 = vmatprep.mubr.f32.mxu0 0.0
        %832 = vmatmul.mubr.f32.gmra.mrb[0].mxu0 %v716
        %v833 = vpop.f32.mrb[0].mxu0
        %v834 = vadd.f32 0.0, %v833
        %v835 = vpop.f32.mrb[0].mxu0
        %836 = vmatprep.mubr.f32.mxu0 0.0
        %837 = vmatmul.mubr.f32.gmra.mrb[0].mxu0 %v719
        %v838 = vpop.f32.mrb[0].mxu0
        %v839 = vadd.f32 0.0, %v838
        %v840 = vpop.f32.mrb[0].mxu0
        %841 = vmatprep.mubr.f32.mxu0 0.0
        %842 = vmatmul.mubr.f32.gmra.mrb[0].mxu0 %v722
        %v843 = vpop.f32.mrb[0].mxu0
        %v844 = vadd.f32 0.0, %v843
        %v845 = vpop.f32.mrb[0].mxu0
        %846 = vmatprep.mubr.f32.mxu0 0.0
        %847 = vmatmul.mubr.f32.gmra.mrb[0].mxu0 %v725
        %v848 = vpop.f32.mrb[0].mxu0
        %v849 = vadd.f32 0.0, %v848
        %v850 = vpop.f32.mrb[0].mxu0
        %851 = vmatprep.mubr.f32.mxu0 0.0
        %852 = vmatmul.mubr.f32.gmra.mrb[0].mxu0 %v728
        %v853 = vpop.f32.mrb[0].mxu0
        %v854 = vadd.f32 0.0, %v853
        %v855 = vpop.f32.mrb[0].mxu0
        %856 = vmatprep.mubr.f32.mxu0 0.0
        %857 = vmatmul.mubr.f32.gmra.mrb[0].mxu0 %v731
        %v858 = vpop.f32.mrb[0].mxu0
        %v859 = vadd.f32 0.0, %v858
        %v860 = vpop.f32.mrb[0].mxu0
        %861 = vmatprep.mubr.f32.mxu0 0.0
        %862 = vmatmul.mubr.f32.gmra.mrb[0].mxu0 %v734
        %v863 = vpop.f32.mrb[0].mxu0
        %v864 = vadd.f32 0.0, %v863
        %v865 = vpop.f32.mrb[0].mxu0
        %866 = vmatprep.mubr.f32.mxu0 0.0
        %867 = vmatmul.mubr.f32.gmra.mrb[0].mxu0 %v737
        %v868 = vpop.f32.mrb[0].mxu0
        %v869 = vadd.f32 0.0, %v868
        %v870 = vpop.f32.mrb[0].mxu0
        %871 = vmatprep.mubr.f32.mxu0 0.0
        %872 = vmatmul.mubr.f32.gmra.mrb[0].mxu0 %v740
        %v873 = vpop.f32.mrb[0].mxu0
        %v874 = vadd.f32 0.0, %v873
        %v875 = vpop.f32.mrb[0].mxu0
        %876 = vmatprep.mubr.f32.mxu0 0.0
        %877 = vmatmul.mubr.f32.gmra.mrb[0].mxu0 %v743
        %v878 = vpop.f32.mrb[0].mxu0
        %v879 = vadd.f32 0.0, %v878
        %v880 = vpop.f32.mrb[0].mxu0
        %881 = vmatprep.mubr.f32.mxu0 0.0
        %882 = vmatmul.mubr.f32.gmra.mrb[0].mxu0 %v746
        %v883 = vpop.f32.mrb[0].mxu0
        %v884 = vadd.f32 0.0, %v883
        %v885 = vpop.f32.mrb[0].mxu0
        %886 = vmatprep.mubr.f32.mxu0 0.0
        %887 = vmatmul.mubr.f32.gmra.mrb[0].mxu0 %v749
        %v888 = vpop.f32.mrb[0].mxu0
        %v889 = vadd.f32 0.0, %v888
        %v890 = vpop.f32.mrb[0].mxu0
        %891 = vmatprep.mubr.f32.mxu0 0.0
        %892 = vmatmul.mubr.f32.gmra.mrb[0].mxu0 %v752
        %v893 = vpop.f32.mrb[0].mxu0
        %v894 = vadd.f32 0.0, %v893
        %v895 = vpop.f32.mrb[0].mxu0
        %896 = vmatprep.mubr.f32.mxu0 0.0
        %897 = vmatmul.mubr.f32.gmra.mrb[0].mxu0 %v755
        %v898 = vpop.f32.mrb[0].mxu0
        %v899 = vadd.f32 0.0, %v898
        %v900 = vpop.f32.mrb[0].mxu0
        %901 = vdwg.mxu0
        %v902 = vmul.f32 %v624, %v824
        %v903 = vmul.f32 %v629, %v829
        %v904 = vmul.f32 %v634, %v834
        %v905 = vmul.f32 %v639, %v839
        %v906 = vmul.f32 %v644, %v844
        %v907 = vmul.f32 %v649, %v849
        %v908 = vmul.f32 %v654, %v854
        %v909 = vmul.f32 %v659, %v859
        %v910 = vmul.f32 %v664, %v864
        %v911 = vmul.f32 %v669, %v869
        %v912 = vmul.f32 %v674, %v874
        %v913 = vmul.f32 %v679, %v879
        %v914 = vmul.f32 %v684, %v884
        %v915 = vmul.f32 %v689, %v889
        %v916 = vmul.f32 %v694, %v894
        %v917 = vmul.f32 %v699, %v899
        %v918 = vld [vmem:[%s4] sm:$0x1]
        %v920 = vlaneseq
        %v921 = vshrl.u32 %v920, 7
        %v922 = vsub.s32 0, %v921
        %v923 = vrot.slane %v918, %v922
        %v925 = vmul.f32 %v902, %v923
        %v926 = vmul.f32 %v903, %v923
        %v927 = vmul.f32 %v904, %v923
        %v928 = vmul.f32 %v905, %v923
        %v929 = vmul.f32 %v906, %v923
        %v930 = vmul.f32 %v907, %v923
        %v931 = vmul.f32 %v908, %v923
        %v932 = vmul.f32 %v909, %v923
        %v933 = vmul.f32 %v910, %v923
        %v934 = vmul.f32 %v911, %v923
        %v935 = vmul.f32 %v912, %v923
        %v936 = vmul.f32 %v913, %v923
        %v937 = vmul.f32 %v914, %v923
        %v938 = vmul.f32 %v915, %v923
        %v939 = vmul.f32 %v916, %v923
        %v940 = vmul.f32 %v917, %v923
        %vm941 = vcmask 261120
        %v942 = vsel %vm941, %v925, 0.0
        %943 = vadd.xlane.f32.xlu0 %v942
        %v944 = vpop.xlane.xlu0 %943
        %v945 = vsel %vm941, %v926, 0.0
        %946 = vadd.xlane.f32.xlu0 %v945
        %v947 = vpop.xlane.xlu0 %946
        %v948 = vsel %vm941, %v927, 0.0
        %949 = vadd.xlane.f32.xlu0 %v948
        %v950 = vpop.xlane.xlu0 %949
        %v951 = vsel %vm941, %v928, 0.0
        %952 = vadd.xlane.f32.xlu0 %v951
        %v953 = vpop.xlane.xlu0 %952
        %v954 = vsel %vm941, %v929, 0.0
        %955 = vadd.xlane.f32.xlu0 %v954
        %v956 = vpop.xlane.xlu0 %955
        %v957 = vsel %vm941, %v930, 0.0
        %958 = vadd.xlane.f32.xlu0 %v957
        %v959 = vpop.xlane.xlu0 %958
        %v960 = vsel %vm941, %v931, 0.0
        %961 = vadd.xlane.f32.xlu0 %v960
        %v962 = vpop.xlane.xlu0 %961
        %v963 = vsel %vm941, %v932, 0.0
        %964 = vadd.xlane.f32.xlu0 %v963
        %v965 = vpop.xlane.xlu0 %964
        %v966 = vsel %vm941, %v933, 0.0
        %967 = vadd.xlane.f32.xlu0 %v966
        %v968 = vpop.xlane.xlu0 %967
        %v969 = vsel %vm941, %v934, 0.0
        %970 = vadd.xlane.f32.xlu0 %v969
        %v971 = vpop.xlane.xlu0 %970
        %v972 = vsel %vm941, %v935, 0.0
        %973 = vadd.xlane.f32.xlu0 %v972
        %v974 = vpop.xlane.xlu0 %973
        %v975 = vsel %vm941, %v936, 0.0
        %976 = vadd.xlane.f32.xlu0 %v975
        %v977 = vpop.xlane.xlu0 %976
        %v978 = vsel %vm941, %v937, 0.0
        %979 = vadd.xlane.f32.xlu0 %v978
        %v980 = vpop.xlane.xlu0 %979
        %v981 = vsel %vm941, %v938, 0.0
        %982 = vadd.xlane.f32.xlu0 %v981
        %v983 = vpop.xlane.xlu0 %982
        %v984 = vsel %vm941, %v939, 0.0
        %985 = vadd.xlane.f32.xlu0 %v984
        %v986 = vpop.xlane.xlu0 %985
        %v987 = vsel %vm941, %v940, 0.0
        %988 = vadd.xlane.f32.xlu0 %v987
        %v989 = vpop.xlane.xlu0 %988
        %s990 = sld [smem:[#allocation2]]
        %v991 = vstv %s990
        %v992 = vadd.f32 %v944, %v991
        %v993 = vadd.f32 %v947, %v991
        %v994 = vadd.f32 %v950, %v991
        %v995 = vadd.f32 %v953, %v991
        %v996 = vadd.f32 %v956, %v991
        %v997 = vadd.f32 %v959, %v991
        %v998 = vadd.f32 %v962, %v991
        %v999 = vadd.f32 %v965, %v991
        %v1000 = vadd.f32 %v968, %v991
        %v1001 = vadd.f32 %v971, %v991
        %v1002 = vadd.f32 %v974, %v991
        %v1003 = vadd.f32 %v977, %v991
        %v1004 = vadd.f32 %v980, %v991
        %v1005 = vadd.f32 %v983, %v991
        %v1006 = vadd.f32 %v986, %v991
        %v1007 = vadd.f32 %v989, %v991
        %v1008 = vxor.u32 %v992, 2147483648
        %v1009 = vxor.u32 %v993, 2147483648
        %v1010 = vxor.u32 %v994, 2147483648
        %v1011 = vxor.u32 %v995, 2147483648
        %v1012 = vxor.u32 %v996, 2147483648
        %v1013 = vxor.u32 %v997, 2147483648
        %v1014 = vxor.u32 %v998, 2147483648
        %v1015 = vxor.u32 %v999, 2147483648
        %v1016 = vxor.u32 %v1000, 2147483648
        %v1017 = vxor.u32 %v1001, 2147483648
        %v1018 = vxor.u32 %v1002, 2147483648
        %v1019 = vxor.u32 %v1003, 2147483648
        %v1020 = vxor.u32 %v1004, 2147483648
        %v1021 = vxor.u32 %v1005, 2147483648
        %v1022 = vxor.u32 %v1006, 2147483648
        %v1023 = vxor.u32 %v1007, 2147483648
        %v1024 = vmul.f32 %v1008, 1.442695
        %v1025 = vpow.pop %v1024
        %v1026 = vmul.f32 %v1009, 1.442695
        %v1027 = vpow.pop %v1026
        %v1028 = vmul.f32 %v1010, 1.442695
        %v1029 = vpow.pop %v1028
        %v1030 = vmul.f32 %v1011, 1.442695
        %v1031 = vpow.pop %v1030
        %v1032 = vmul.f32 %v1012, 1.442695
        %v1033 = vpow.pop %v1032
        %v1034 = vmul.f32 %v1013, 1.442695
        %v1035 = vpow.pop %v1034
        %v1036 = vmul.f32 %v1014, 1.442695
        %v1037 = vpow.pop %v1036
        %v1038 = vmul.f32 %v1015, 1.442695
        %v1039 = vpow.pop %v1038
        %v1040 = vmul.f32 %v1016, 1.442695
        %v1041 = vpow.pop %v1040
        %v1042 = vmul.f32 %v1017, 1.442695
        %v1043 = vpow.pop %v1042
        %v1044 = vmul.f32 %v1018, 1.442695
        %v1045 = vpow.pop %v1044
        %v1046 = vmul.f32 %v1019, 1.442695
        %v1047 = vpow.pop %v1046
        %v1048 = vmul.f32 %v1020, 1.442695
        %v1049 = vpow.pop %v1048
        %v1050 = vmul.f32 %v1021, 1.442695
        %v1051 = vpow.pop %v1050
        %v1052 = vmul.f32 %v1022, 1.442695
        %v1053 = vpow.pop %v1052
        %v1054 = vmul.f32 %v1023, 1.442695
        %v1055 = vpow.pop %v1054
        %v1056 = vadd.f32 %v1025, 1.0
        %v1057 = vadd.f32 %v1027, 1.0
        %v1058 = vadd.f32 %v1029, 1.0
        %v1059 = vadd.f32 %v1031, 1.0
        %v1060 = vadd.f32 %v1033, 1.0
        %v1061 = vadd.f32 %v1035, 1.0
        %v1062 = vadd.f32 %v1037, 1.0
        %v1063 = vadd.f32 %v1039, 1.0
        %v1064 = vadd.f32 %v1041, 1.0
        %v1065 = vadd.f32 %v1043, 1.0
        %v1066 = vadd.f32 %v1045, 1.0
        %v1067 = vadd.f32 %v1047, 1.0
        %v1068 = vadd.f32 %v1049, 1.0
        %v1069 = vadd.f32 %v1051, 1.0
        %v1070 = vadd.f32 %v1053, 1.0
        %v1071 = vadd.f32 %v1055, 1.0
        %v1072 = vrcp.pop %v1056
        %v1073 = vmul.f32 1.0, %v1072
        %v1074 = vrcp.pop %v1057
        %v1075 = vmul.f32 1.0, %v1074
        %v1076 = vrcp.pop %v1058
        %v1077 = vmul.f32 1.0, %v1076
        %v1078 = vrcp.pop %v1059
        %v1079 = vmul.f32 1.0, %v1078
        %v1080 = vrcp.pop %v1060
        %v1081 = vmul.f32 1.0, %v1080
        %v1082 = vrcp.pop %v1061
        %v1083 = vmul.f32 1.0, %v1082
        %v1084 = vrcp.pop %v1062
        %v1085 = vmul.f32 1.0, %v1084
        %v1086 = vrcp.pop %v1063
        %v1087 = vmul.f32 1.0, %v1086
        %v1088 = vrcp.pop %v1064
        %v1089 = vmul.f32 1.0, %v1088
        %v1090 = vrcp.pop %v1065
        %v1091 = vmul.f32 1.0, %v1090
        %v1092 = vrcp.pop %v1066
        %v1093 = vmul.f32 1.0, %v1092
        %v1094 = vrcp.pop %v1067
        %v1095 = vmul.f32 1.0, %v1094
        %v1096 = vrcp.pop %v1068
        %v1097 = vmul.f32 1.0, %v1096
        %v1098 = vrcp.pop %v1069
        %v1099 = vmul.f32 1.0, %v1098
        %v1100 = vrcp.pop %v1070
        %v1101 = vmul.f32 1.0, %v1100
        %v1102 = vrcp.pop %v1071
        %v1103 = vmul.f32 1.0, %v1102
        %v1120 = vlaneseq
        %v1121 = vshrl.u32 %v1120, 7
        %v1122 = vsub.s32 %v291, %v1121
        %v1123 = vrot.slane %v1073, %v1122
        %v1124 = vadd.s32 %v291, 4294967288
        %v1125 = vlaneseq
        %v1126 = vshrl.u32 %v1125, 7
        %v1127 = vsub.s32 %v1124, %v1126
        %v1128 = vrot.slane %v1075, %v1127
        %vm1129 = vcmask 130112
        %v1130 = vsel %vm1129, %v1128, %v1123
        %v1131 = vadd.s32 %v291, 4294967280
        %v1132 = vlaneseq
        %v1133 = vshrl.u32 %v1132, 7
        %v1134 = vsub.s32 %v1131, %v1133
        %v1135 = vrot.slane %v1077, %v1134
        %vm1136 = vcmask 195712
        %v1137 = vsel %vm1136, %v1135, %v1130
        %v1138 = vadd.s32 %v291, 4294967272
        %v1139 = vlaneseq
        %v1140 = vshrl.u32 %v1139, 7
        %v1141 = vsub.s32 %v1138, %v1140
        %v1142 = vrot.slane %v1079, %v1141
        %vm1143 = vcmask 261312
        %v1144 = vsel %vm1143, %v1142, %v1137
        %v1145 = vadd.s32 %v291, 4294967264
        %v1146 = vlaneseq
        %v1147 = vshrl.u32 %v1146, 7
        %v1148 = vsub.s32 %v1145, %v1147
        %v1149 = vrot.slane %v1081, %v1148
        %vm1150 = vcmask 326912
        %v1151 = vsel %vm1150, %v1149, %v1144
        %v1152 = vadd.s32 %v291, 4294967256
        %v1153 = vlaneseq
        %v1154 = vshrl.u32 %v1153, 7
        %v1155 = vsub.s32 %v1152, %v1154
        %v1156 = vrot.slane %v1083, %v1155
        %vm1157 = vcmask 392512
        %v1158 = vsel %vm1157, %v1156, %v1151
        %v1159 = vadd.s32 %v291, 4294967248
        %v1160 = vlaneseq
        %v1161 = vshrl.u32 %v1160, 7
        %v1162 = vsub.s32 %v1159, %v1161
        %v1163 = vrot.slane %v1085, %v1162
        %vm1164 = vcmask 458112
        %v1165 = vsel %vm1164, %v1163, %v1158
        %v1166 = vadd.s32 %v291, 4294967240
        %v1167 = vlaneseq
        %v1168 = vshrl.u32 %v1167, 7
        %v1169 = vsub.s32 %v1166, %v1168
        %v1170 = vrot.slane %v1087, %v1169
        %vm1171 = vcmask 523712
        %v1172 = vsel %vm1171, %v1170, %v1165
        %v1173 = vadd.s32 %v291, 4294967232
        %v1174 = vlaneseq
        %v1175 = vshrl.u32 %v1174, 7
        %v1176 = vsub.s32 %v1173, %v1175
        %v1177 = vrot.slane %v1089, %v1176
        %vm1178 = vcmask 589312
        %v1179 = vsel %vm1178, %v1177, %v1172
        %v1180 = vadd.s32 %v291, 4294967224
        %v1181 = vlaneseq
        %v1182 = vshrl.u32 %v1181, 7
        %v1183 = vsub.s32 %v1180, %v1182
        %v1184 = vrot.slane %v1091, %v1183
        %vm1185 = vcmask 654912
        %v1186 = vsel %vm1185, %v1184, %v1179
        %v1187 = vadd.s32 %v291, 4294967216
        %v1188 = vlaneseq
        %v1189 = vshrl.u32 %v1188, 7
        %v1190 = vsub.s32 %v1187, %v1189
        %v1191 = vrot.slane %v1093, %v1190
        %vm1192 = vcmask 720512
        %v1193 = vsel %vm1192, %v1191, %v1186
        %v1194 = vadd.s32 %v291, 4294967208
        %v1195 = vlaneseq
        %v1196 = vshrl.u32 %v1195, 7
        %v1197 = vsub.s32 %v1194, %v1196
        %v1198 = vrot.slane %v1095, %v1197
        %vm1199 = vcmask 786112
        %v1200 = vsel %vm1199, %v1198, %v1193
        %v1201 = vadd.s32 %v291, 4294967200
        %v1202 = vlaneseq
        %v1203 = vshrl.u32 %v1202, 7
        %v1204 = vsub.s32 %v1201, %v1203
        %v1205 = vrot.slane %v1097, %v1204
        %vm1206 = vcmask 851712
        %v1207 = vsel %vm1206, %v1205, %v1200
        %v1208 = vadd.s32 %v291, 4294967192
        %v1209 = vlaneseq
        %v1210 = vshrl.u32 %v1209, 7
        %v1211 = vsub.s32 %v1208, %v1210
        %v1212 = vrot.slane %v1099, %v1211
        %vm1213 = vcmask 917312
        %v1214 = vsel %vm1213, %v1212, %v1207
        %v1215 = vadd.s32 %v291, 4294967184
        %v1216 = vlaneseq
        %v1217 = vshrl.u32 %v1216, 7
        %v1218 = vsub.s32 %v1215, %v1217
        %v1219 = vrot.slane %v1101, %v1218
        %vm1220 = vcmask 982912
        %v1221 = vsel %vm1220, %v1219, %v1214
        %v1222 = vadd.s32 %v291, 4294967176
        %v1223 = vlaneseq
        %v1224 = vshrl.u32 %v1223, 7
        %v1225 = vsub.s32 %v1222, %v1224
        %v1226 = vrot.slane %v1103, %v1225
        %vm1227 = vcmask 1048512
        %v1228 = vsel %vm1227, %v1226, %v1221
        %1230 = vst [vmem:[%s261] sm:$0x1] %v1228
        %s1231 = sand.u32 %s165, 1
        %s1232 = scalar_lea.sflag [#allocation4], %s1231
        %s1233 = sand.u32 %s165, 1
        %s1234 = scalar_lea.vmem [#allocation3], %s1233
        // Predicated region
        $region45: #{tpu_custom_call.1} parent=43 // pred_check
          %p1235 = pneg %p175
        $region46: #{tpu_custom_call.1} parent=43 // pred_check_branch
          %1237 = sbr.rel (%p1235) target = $region48
        $region47: #{tpu_custom_call.1} parent=43 // pred_region
          %s1239 = ssub.s32 16, 16
          %1240 = vsyncadd %s1232, %s1239
          %s1241 = smul.addr %s21, 16
          %s1242 = scalar_lea.hbm %s6, %s1241
          %s1244 = sshll.u32 %s1234, 4
          %s1245 = int_to_ptr.vmem [resolvable:$true] %s1244
          %1247 = dma.vmem_to_hbm [thread:$0]  %s1245, 16, %s1242, %s1232
        $region48: #{tpu_custom_call.1} parent=43 // pred_fallthru
          _
      $region44: #{tpu_custom_call.1} parent=5 // pred_fallthru
        _
      %p1248 = scmp.le.s32.totalorder 2, %s16
      // Predicated region
      $region49: #{tpu_custom_call.1} parent=5 // pred_check
        %p1249 = pneg %p1248
      $region50: #{tpu_custom_call.1} parent=5 // pred_check_branch
        %1251 = sbr.rel (%p1249) target = $region52
      $region51: #{tpu_custom_call.1} parent=5 // pred_region
        %s1252 = ssub.s32 %s16, 2
        // Predicated region
        $region53: #{tpu_custom_call.1} parent=51 // pred_check
          %p1253 = pneg %p181
        $region54: #{tpu_custom_call.1} parent=51 // pred_check_branch
          %1255 = sbr.rel (%p1253) target = $region56
        $region55: #{tpu_custom_call.1} parent=51 // pred_region
          %s1256 = sand.u32 %s166, 1
          %s1257 = scalar_lea.sflag [#allocation4], %s1256
          %s1258 = sand.u32 %s166, 1
          %s1259 = scalar_lea.vmem [#allocation3], %s1258
          %1260 = dma.done %s1257, 16
        $region56: #{tpu_custom_call.1} parent=51 // pred_fallthru
          _
      $region52: #{tpu_custom_call.1} parent=5 // pred_fallthru
        _
    $region6: #{tpu_custom_call.1} parent=1 // loop_footer
      %s20 = sadd.s32 1, %s16
    $region7: #{tpu_custom_call.1} parent=1 // loop_footer_branch
      %15 = sbr.rel target = $region3
    $region8: #{tpu_custom_call.1} parent=1 // loop_exit
      _
    %1261 = vsyncpa [#allocation4], 1
    %s1262 = scalar_lea.sflag [#allocation4], 1
    %1263 = vsyncpa %s1262, 1

</llo_original>
